<compile_context>
chip_gen: v6e
topology: v6e:2x2x1
jax: 0.10.0
libtpu: 0.0.40
codegen_flags: <defaults>
</compile_context>

<pallas_src>
from functools import partial

import jax
import jax.numpy as jnp
from jax.experimental import pallas as pl
from jax.experimental.pallas import tpu as pltpu


def gap_linear_kernel(x_ref, w_ref, b_ref, o_ref, acc_ref, *, inv_hw):
    # x_ref : (B_tile, C_pad, HW_tile)  native dtype
    # w_ref : (C_pad, NC_pad) f32       (resident across grid)
    # b_ref : (1, NC_pad) f32           (resident across grid)
    # o_ref : (B_tile, NC_pad) f32
    # acc_ref: (B_tile, C_pad) f32 VMEM scratch accumulator
    k = pl.program_id(1)

    @pl.when(k == 0)
    def _():
        acc_ref[...] = jnp.zeros_like(acc_ref)

    # Partial spatial sum for this chunk; accumulate in f32.
    acc_ref[...] += jnp.sum(x_ref[...].astype(jnp.float32), axis=-1)

    @pl.when(k == pl.num_programs(1) - 1)
    def _():
        # Single scale (mean) applied once on the tiny (B_tile, C_pad) tile,
        # then the (B_tile, C_pad) @ (C_pad, NC_pad) matmul on the MXU.
        pooled = acc_ref[...] * inv_hw
        logits = jnp.dot(pooled, w_ref[...],
                         preferred_element_type=jnp.float32) + b_ref[...]
        o_ref[...] = logits.astype(o_ref.dtype)


def base_model_forward(x_nchw, w, b, *, b_tile=8, max_hw_tile=512,
                       vmem_limit_bytes=48 * 1024 * 1024):
    """x_nchw: (B, C, H, W) any float dtype ; w: (C, NC) ; b: (NC,)
    -> logits (B, NC) float32
    """
    B, C, H, W = x_nchw.shape
    C_w, NC = w.shape
    assert C_w == C, "weight C dim must match input channels"
    HW = H * W

    def rup(v, m):
        return ((v + m - 1) // m) * m

    # Padding for TPU tiling: C to sublane multiple (8), NC to lane multiple
    # (128) so output stores are lane-dense, B to a whole number of batch tiles.
    B_pad = rup(B, b_tile)
    C_pad = rup(C, 8)
    NC_pad = rup(NC, 128)

    # Spatial tile: multiple of 128, sized so the double-buffered x tiles stay
    # within a conservative budget (fits comfortably even in v7x's 64 MiB VMEM).
    itemsize = x_nchw.dtype.itemsize
    x_tile_budget = 24 * 1024 * 1024  # bytes for both x DMA buffers combined
    fit = x_tile_budget // (2 * b_tile * C_pad * itemsize)
    hw_tile = max(128, min(max_hw_tile, (fit // 128) * 128))
    HW_pad = rup(HW, hw_tile)

    # Keep x in its native dtype (e.g. bf16 streams half the HBM bytes);
    # the kernel accumulates in f32.
    x3 = x_nchw.reshape(B, C, HW)
    if (B_pad, C_pad, HW_pad) != (B, C, HW):
        x3 = jnp.pad(x3, ((0, B_pad - B), (0, C_pad - C), (0, HW_pad - HW)))
    w_p = jnp.pad(w.astype(jnp.float32), ((0, C_pad - C), (0, NC_pad - NC)))
    b_p = jnp.pad(b.astype(jnp.float32), (0, NC_pad - NC)).reshape(1, NC_pad)

    grid = (B_pad // b_tile, HW_pad // hw_tile)
    inv_hw = 1.0 / float(HW)  # divide by the *real* spatial size (zero padding)

    out = pl.pallas_call(
        partial(gap_linear_kernel, inv_hw=inv_hw),
        out_shape=jax.ShapeDtypeStruct((B_pad, NC_pad), jnp.float32),
        grid_spec=pltpu.PrefetchScalarGridSpec(
            num_scalar_prefetch=0,
            grid=grid,
            in_specs=[
                # x: new batch tile per i, new spatial chunk per k
                pl.BlockSpec((b_tile, C_pad, hw_tile), lambda i, k: (i, 0, k)),
                # w, b: resident in VMEM across all grid steps
                pl.BlockSpec((C_pad, NC_pad), lambda i, k: (0, 0)),
                pl.BlockSpec((1, NC_pad), lambda i, k: (0, 0)),
            ],
            # output block depends only on the batch tile -> accumulator-style
            out_specs=pl.BlockSpec((b_tile, NC_pad), lambda i, k: (i, 0)),
            scratch_shapes=[pltpu.VMEM((b_tile, C_pad), jnp.float32)],
        ),
        compiler_params=pltpu.CompilerParams(
            # batch axis parallel (shards across v7x's 2 TCs), reduction axis
            # last and arbitrary
            dimension_semantics=("parallel", "arbitrary"),
            vmem_limit_bytes=vmem_limit_bytes,
        ),
    )(x3, w_p, b_p)

    return out[:B, :NC]


if __name__ == "__main__":
    key = jax.random.PRNGKey(0)
    kx, kw, kb = jax.random.split(key, 3)

    # small shapes consistent with an NCHW image classifier
    B, C, H, W = 2, 4, 16, 16
    num_classes = 8

    x = jax.random.normal(kx, (B, C, H, W), dtype=jnp.float32)
    w = jax.random.normal(kw, (C, num_classes), dtype=jnp.float32) * 0.1
    b = jax.random.normal(kb, (num_classes,), dtype=jnp.float32) * 0.01

    out = base_model_forward(x, w, b)
    jax.block_until_ready(out)

    # reference check in plain JAX
    ref = jnp.mean(x.reshape(B, C, H * W), axis=-1) @ w + b
    assert out.shape == (B, num_classes)
    assert jnp.allclose(out, ref, atol=1e-4, rtol=1e-4)

    print("KERNEL_OK")
</pallas_src>

<mosaic_0001>
module attributes {stable_mosaic.version = 11 : i64} {
  func.func @gap_linear_kernel(%arg0: i32, %arg1: i32, %arg2: memref<8x8x512xf32, #tpu.memory_space<vmem>>, %arg3: memref<8x128xf32, #tpu.memory_space<vmem>>, %arg4: memref<1x128xf32, #tpu.memory_space<vmem>>, %arg5: memref<8x128xf32, #tpu.memory_space<vmem>>, %arg6: memref<8x8xf32, #tpu.memory_space<vmem>>) attributes {dimension_semantics = [#tpu.dimension_semantics<parallel>, #tpu.dimension_semantics<arbitrary>], iteration_bounds = array<i64: 1, 1>, scalar_prefetch = 0 : i64, scratch_operands = 1 : i64, tpu.core_type = #tpu.core_type<tc>, window_params = [{transform_indices = @transform_0, window_bounds = array<i64: 8, 8, 512>}, {pipeline_mode = #tpu.pipeline_mode<synchronous>, transform_indices = @transform_1, window_bounds = array<i64: 8, 128>}, {pipeline_mode = #tpu.pipeline_mode<synchronous>, transform_indices = @transform_2, window_bounds = array<i64: 1, 128>}, {transform_indices = @transform_3, window_bounds = array<i64: 8, 128>}]} {
    %c0_i32 = arith.constant 0 : i32
    %0 = arith.cmpi eq, %arg1, %c0_i32 : i32
    %1 = arith.extui %0 : i1 to i32
    %c0_i32_0 = arith.constant 0 : i32
    %2 = arith.cmpi ne, %1, %c0_i32_0 : i32
    scf.if %2 {
      %cst_9 = arith.constant 0.000000e+00 : f32
      %11 = vector.broadcast %cst_9 : f32 to vector<8x8xf32>
      %c0_10 = arith.constant 0 : index
      %c0_11 = arith.constant 0 : index
      %12 = vector.load %arg6[%c0_10, %c0_11] : memref<8x8xf32, #tpu.memory_space<vmem>>, vector<8x8xf32>
      tpu.vector_store %arg6[%c0_10, %c0_11], %11 {strides = array<i32>} : memref<8x8xf32, #tpu.memory_space<vmem>>, vector<8x8xf32>,
    } else {
    }
    %c0 = arith.constant 0 : index
    %c0_1 = arith.constant 0 : index
    %3 = vector.load %arg6[%c0, %c0_1] : memref<8x8xf32, #tpu.memory_space<vmem>>, vector<8x8xf32>
    %c0_2 = arith.constant 0 : index
    %c0_3 = arith.constant 0 : index
    %c0_4 = arith.constant 0 : index
    %4 = vector.load %arg2[%c0_2, %c0_3, %c0_4] : memref<8x8x512xf32, #tpu.memory_space<vmem>>, vector<8x8x512xf32>
    %cst = arith.constant dense<0.000000e+00> : vector<8x8xf32>
    %5 = vector.multi_reduction <add>, %4, %cst [2] : vector<8x8x512xf32> to vector<8x8xf32>
    %6 = arith.addf %3, %5 : vector<8x8xf32>
    %c0_5 = arith.constant 0 : index
    %c0_6 = arith.constant 0 : index
    %7 = vector.load %arg6[%c0_5, %c0_6] : memref<8x8xf32, #tpu.memory_space<vmem>>, vector<8x8xf32>
    tpu.vector_store %arg6[%c0_5, %c0_6], %6 {strides = array<i32>} : memref<8x8xf32, #tpu.memory_space<vmem>>, vector<8x8xf32>,
    %c0_i32_7 = arith.constant 0 : i32
    %8 = arith.cmpi eq, %arg1, %c0_i32_7 : i32
    %9 = arith.extui %8 : i1 to i32
    %c0_i32_8 = arith.constant 0 : i32
    %10 = arith.cmpi ne, %9, %c0_i32_8 : i32
    scf.if %10 {
      %c0_9 = arith.constant 0 : index
      %c0_10 = arith.constant 0 : index
      %11 = vector.load %arg6[%c0_9, %c0_10] : memref<8x8xf32, #tpu.memory_space<vmem>>, vector<8x8xf32>
      %cst_11 = arith.constant 3.906250e-03 : f32
      %12 = vector.broadcast %cst_11 : f32 to vector<8x8xf32>
      %13 = arith.mulf %11, %12 : vector<8x8xf32>
      %c0_12 = arith.constant 0 : index
      %c0_13 = arith.constant 0 : index
      %14 = vector.load %arg3[%c0_12, %c0_13] : memref<8x128xf32, #tpu.memory_space<vmem>>, vector<8x128xf32>
      %cst_14 = arith.constant dense<0.000000e+00> : vector<8x128xf32>
      %15 = tpu.matmul %13, %14, %cst_14 {dimension_numbers = #tpu.dot_dimension_numbers<[1], [0], [0], [1], [0, 0, 1, 1], [], []>} : vector<8x8xf32>, vector<8x128xf32>, vector<8x128xf32> -> vector<8x128xf32>
      %c0_15 = arith.constant 0 : index
      %c0_16 = arith.constant 0 : index
      %16 = vector.load %arg4[%c0_15, %c0_16] : memref<1x128xf32, #tpu.memory_space<vmem>>, vector<1x128xf32>
      %17 = vector.broadcast %16 : vector<1x128xf32> to vector<8x128xf32>
      %18 = arith.addf %15, %17 : vector<8x128xf32>
      %c0_17 = arith.constant 0 : index
      %c0_18 = arith.constant 0 : index
      %19 = vector.load %arg5[%c0_17, %c0_18] : memref<8x128xf32, #tpu.memory_space<vmem>>, vector<8x128xf32>
      tpu.vector_store %arg5[%c0_17, %c0_18], %18 {strides = array<i32>} : memref<8x128xf32, #tpu.memory_space<vmem>>, vector<8x128xf32>,
    } else {
    }
    return
  }
  func.func @transform_0(%arg0: i32, %arg1: i32) -> (i32, i32, i32) {
    %c0_i32 = arith.constant 0 : i32
    %c0_i32_0 = arith.constant 0 : i32
    return %arg0, %c0_i32, %arg1 : i32, i32, i32
  }
  func.func @transform_1(%arg0: i32, %arg1: i32) -> (i32, i32) {
    %c0_i32 = arith.constant 0 : i32
    %c0_i32_0 = arith.constant 0 : i32
    %c0_i32_1 = arith.constant 0 : i32
    return %c0_i32, %c0_i32_0 : i32, i32
  }
  func.func @transform_2(%arg0: i32, %arg1: i32) -> (i32, i32) {
    %c0_i32 = arith.constant 0 : i32
    %c0_i32_0 = arith.constant 0 : i32
    %c0_i32_1 = arith.constant 0 : i32
    return %c0_i32, %c0_i32_0 : i32, i32
  }
  func.func @transform_3(%arg0: i32, %arg1: i32) -> (i32, i32) {
    %c0_i32 = arith.constant 0 : i32
    %c0_i32_0 = arith.constant 0 : i32
    return %arg0, %c0_i32 : i32, i32
  }
}

</mosaic_0001>

<llo_original>
// kernel: tpu_custom_call.1
$region0: #{tpu_custom_call.1}
  #allocation0 [shape = 'u32[]', space=smem, size = 0x4, offset = 0x4, fixed_abs, tag = 'smem constant byte address 0x4 - core index']
  #allocation1 [shape = 'u32[144,128]{1,0:T(1,128)}', space=vmem, size = 0x12000, scoped, tag = 'internal scratch']
  #allocation2 [shape = 'f32[8,8]{1,0:T(8,128)}', space=vmem, size = 0x1000, scoped, tag = 'scratch operand']
  %s0 = inlined_call_operand.hbm [shape: f32[8,8,512], index: 0, kind: input, shape index: {}]
  %s1 = inlined_call_operand.hbm [shape: f32[8,128], index: 1, kind: input, shape index: {}]
  %s2 = inlined_call_operand.vmem [shape: f32[1,128], index: 2, kind: input, shape index: {}]
  %s3 = inlined_call_operand.hbm [shape: f32[8,128], index: 3, kind: output, shape index: {}]
  %s4 = sld [smem:[#allocation0]]
  $region38: #{tpu_custom_call.1} parent=0
    _
  %s6 = ssub.s32 1, %s4
  %s7 = scalar_select 0, %s6, %s4
  $region1: #{tpu_custom_call.1} parent=0
    #allocation3 [shape = 'u8[131072]{0}', space=vmem, size = 0x20000, scoped, tag = 'input window, operand 0, single buffered']
    #allocation4 [shape = 's32[1]{0}', space=sflag, size = 0x4, scoped, tag = 'scoped memory for tpu_custom_call.1']
    #allocation5 [shape = 's32[1]{0}', space=sflag, size = 0x4, scoped, tag = 'scoped memory for tpu_custom_call.1']
    #allocation6 [shape = 'u8[4096]{0}', space=vmem, size = 0x1000, scoped, tag = 'input window, operand 1, single buffered']
    #allocation7 [shape = 's32[1]{0}', space=sflag, size = 0x4, scoped, tag = 'scoped memory for tpu_custom_call.1']
    #allocation8 [shape = 'u8[4096]{0}', space=vmem, size = 0x1000, scoped, tag = 'output window, operand 0, single buffered']
    %8 = vsyncpa [#allocation4], 0
    %9 = vsyncpa [#allocation7], 0
    %10 = vsyncpa [#allocation5], 0
    // Predicated region
    $region2: #{tpu_custom_call.1} parent=1 // pred_check
      _
    $region3: #{tpu_custom_call.1} parent=1 // pred_check_branch
      %12 = sbr.rel (0) target = $region5
    $region4: #{tpu_custom_call.1} parent=1 // pred_region
      %s14 = ssub.s32 4096, 4096
      %15 = vsyncadd [#allocation4], %s14
      %s16 = sshll.u32 [#allocation3], 4
      %s17 = int_to_ptr.vmem [resolvable:$true] %s16
      %22 = dma.hbm_to_vmem [thread:$0]  %s0, 4096, %s17, [#allocation4], 512, 512, 32
    $region5: #{tpu_custom_call.1} parent=1 // pred_fallthru
      _
    // Predicated region
    $region6: #{tpu_custom_call.1} parent=1 // pred_check
      _
    $region7: #{tpu_custom_call.1} parent=1 // pred_check_branch
      %24 = sbr.rel (0) target = $region9
    $region8: #{tpu_custom_call.1} parent=1 // pred_region
      %s26 = ssub.s32 128, 128
      %27 = vsyncadd [#allocation7], %s26
      %s29 = sshll.u32 [#allocation6], 4
      %s30 = int_to_ptr.vmem [resolvable:$true] %s29
      %32 = dma.hbm_to_vmem [thread:$0]  %s1, 128, %s30, [#allocation7]
    $region9: #{tpu_custom_call.1} parent=1 // pred_fallthru
      _
    // Predicated region
    $region10: #{tpu_custom_call.1} parent=1 // pred_check
      _
    $region11: #{tpu_custom_call.1} parent=1 // pred_check_branch
      %34 = sbr.rel (0) target = $region13
    $region12: #{tpu_custom_call.1} parent=1 // pred_region
      _
    $region13: #{tpu_custom_call.1} parent=1 // pred_fallthru
      _
    // Predicated region
    $region14: #{tpu_custom_call.1} parent=1 // pred_check
      _
    $region15: #{tpu_custom_call.1} parent=1 // pred_check_branch
      %36 = sbr.rel (0) target = $region17
    $region16: #{tpu_custom_call.1} parent=1 // pred_region
      %37 = dma.done [#allocation4], 4096
    $region17: #{tpu_custom_call.1} parent=1 // pred_fallthru
      _
    // Predicated region
    $region18: #{tpu_custom_call.1} parent=1 // pred_check
      _
    $region19: #{tpu_custom_call.1} parent=1 // pred_check_branch
      %39 = sbr.rel (0) target = $region21
    $region20: #{tpu_custom_call.1} parent=1 // pred_region
      %40 = dma.done [#allocation7], 128
    $region21: #{tpu_custom_call.1} parent=1 // pred_fallthru
      _
    %p41 = scmp.eq.s32.totalorder 0, 0
    // Predicated region
    $region22: #{tpu_custom_call.1} parent=1 // pred_check
      %p42 = pneg %p41
    $region23: #{tpu_custom_call.1} parent=1 // pred_check_branch
      %44 = sbr.rel (%p42) target = $region25
    $region24: #{tpu_custom_call.1} parent=1 // pred_region
      %vm45 = vcmask 64512
      %46 = vst.msk [vmem:[#allocation2] sm:$0xff] %vm45, 0.0
    $region25: #{tpu_custom_call.1} parent=1 // pred_fallthru
      _
    %v47 = vld [vmem:[#allocation2] sm:$0xff]
    %v48 = vld [vmem:[#allocation3] sm:$0xff]
    %v49 = vld [vmem:[#allocation3 + $0x8] sm:$0xff]
    %v50 = vld [vmem:[#allocation3 + $0x10] sm:$0xff]
    %v51 = vld [vmem:[#allocation3 + $0x18] sm:$0xff]
    %v52 = vld [vmem:[#allocation3 + $0x20] sm:$0xff]
    %v53 = vld [vmem:[#allocation3 + $0x28] sm:$0xff]
    %v54 = vld [vmem:[#allocation3 + $0x30] sm:$0xff]
    %v55 = vld [vmem:[#allocation3 + $0x38] sm:$0xff]
    %v56 = vld [vmem:[#allocation3 + $0x40] sm:$0xff]
    %v57 = vld [vmem:[#allocation3 + $0x48] sm:$0xff]
    %v58 = vld [vmem:[#allocation3 + $0x50] sm:$0xff]
    %v59 = vld [vmem:[#allocation3 + $0x58] sm:$0xff]
    %v60 = vld [vmem:[#allocation3 + $0x60] sm:$0xff]
    %v61 = vld [vmem:[#allocation3 + $0x68] sm:$0xff]
    %v62 = vld [vmem:[#allocation3 + $0x70] sm:$0xff]
    %v63 = vld [vmem:[#allocation3 + $0x78] sm:$0xff]
    %v64 = vld [vmem:[#allocation3 + $0x80] sm:$0xff]
    %v65 = vld [vmem:[#allocation3 + $0x88] sm:$0xff]
    %v66 = vld [vmem:[#allocation3 + $0x90] sm:$0xff]
    %v67 = vld [vmem:[#allocation3 + $0x98] sm:$0xff]
    %v68 = vld [vmem:[#allocation3 + $0xa0] sm:$0xff]
    %v69 = vld [vmem:[#allocation3 + $0xa8] sm:$0xff]
    %v70 = vld [vmem:[#allocation3 + $0xb0] sm:$0xff]
    %v71 = vld [vmem:[#allocation3 + $0xb8] sm:$0xff]
    %v72 = vld [vmem:[#allocation3 + $0xc0] sm:$0xff]
    %v73 = vld [vmem:[#allocation3 + $0xc8] sm:$0xff]
    %v74 = vld [vmem:[#allocation3 + $0xd0] sm:$0xff]
    %v75 = vld [vmem:[#allocation3 + $0xd8] sm:$0xff]
    %v76 = vld [vmem:[#allocation3 + $0xe0] sm:$0xff]
    %v77 = vld [vmem:[#allocation3 + $0xe8] sm:$0xff]
    %v78 = vld [vmem:[#allocation3 + $0xf0] sm:$0xff]
    %v79 = vld [vmem:[#allocation3 + $0xf8] sm:$0xff]
    %v80 = vadd.f32 %v48, %v49
    %v81 = vadd.f32 %v80, %v50
    %v82 = vadd.f32 %v81, %v51
    %83 = vadd.xlane.f32.xlu0 %v82
    %v84 = vpop.xlane.xlu0 %83
    %v85 = vadd.f32 %v52, %v53
    %v86 = vadd.f32 %v85, %v54
    %v87 = vadd.f32 %v86, %v55
    %88 = vadd.xlane.f32.xlu0 %v87
    %v89 = vpop.xlane.xlu0 %88
    %v90 = vadd.f32 %v56, %v57
    %v91 = vadd.f32 %v90, %v58
    %v92 = vadd.f32 %v91, %v59
    %93 = vadd.xlane.f32.xlu0 %v92
    %v94 = vpop.xlane.xlu0 %93
    %v95 = vadd.f32 %v60, %v61
    %v96 = vadd.f32 %v95, %v62
    %v97 = vadd.f32 %v96, %v63
    %98 = vadd.xlane.f32.xlu0 %v97
    %v99 = vpop.xlane.xlu0 %98
    %v100 = vadd.f32 %v64, %v65
    %v101 = vadd.f32 %v100, %v66
    %v102 = vadd.f32 %v101, %v67
    %103 = vadd.xlane.f32.xlu0 %v102
    %v104 = vpop.xlane.xlu0 %103
    %v105 = vadd.f32 %v68, %v69
    %v106 = vadd.f32 %v105, %v70
    %v107 = vadd.f32 %v106, %v71
    %108 = vadd.xlane.f32.xlu0 %v107
    %v109 = vpop.xlane.xlu0 %108
    %v110 = vadd.f32 %v72, %v73
    %v111 = vadd.f32 %v110, %v74
    %v112 = vadd.f32 %v111, %v75
    %113 = vadd.xlane.f32.xlu0 %v112
    %v114 = vpop.xlane.xlu0 %113
    %v115 = vadd.f32 %v76, %v77
    %v116 = vadd.f32 %v115, %v78
    %v117 = vadd.f32 %v116, %v79
    %118 = vadd.xlane.f32.xlu0 %v117
    %v119 = vpop.xlane.xlu0 %118
    %v128 = vlaneseq
    %v129 = vand.u32 %v128, 127
    %v130 = vlaneseq
    %v131 = vshrl.u32 %v130, 7
    %v132 = vsub.s32 %v129, %v131
    %v133 = vrot.slane %v84, %v132
    %v134 = vlaneseq
    %v135 = vshrl.u32 %v134, 7
    %v136 = vsub.s32 %v129, %v135
    %v137 = vrot.slane %v89, %v136
    %v138 = vlaneseq
    %v139 = vshrl.u32 %v138, 7
    %v140 = vsub.s32 %v129, %v139
    %v141 = vrot.slane %v94, %v140
    %v142 = vlaneseq
    %v143 = vshrl.u32 %v142, 7
    %v144 = vsub.s32 %v129, %v143
    %v145 = vrot.slane %v99, %v144
    %v146 = vlaneseq
    %v147 = vshrl.u32 %v146, 7
    %v148 = vsub.s32 %v129, %v147
    %v149 = vrot.slane %v104, %v148
    %v150 = vlaneseq
    %v151 = vshrl.u32 %v150, 7
    %v152 = vsub.s32 %v129, %v151
    %v153 = vrot.slane %v109, %v152
    %v154 = vlaneseq
    %v155 = vshrl.u32 %v154, 7
    %v156 = vsub.s32 %v129, %v155
    %v157 = vrot.slane %v114, %v156
    %v158 = vlaneseq
    %v159 = vshrl.u32 %v158, 7
    %v160 = vsub.s32 %v129, %v159
    %v161 = vrot.slane %v119, %v160
    %vm162 = vcmask 1041409
    %v163 = vsel %vm162, %v137, %v133
    %vm164 = vcmask 1042434
    %v165 = vsel %vm164, %v141, %v163
    %vm166 = vcmask 1043459
    %v167 = vsel %vm166, %v145, %v165
    %vm168 = vcmask 1044484
    %v169 = vsel %vm168, %v149, %v167
    %vm170 = vcmask 1045509
    %v171 = vsel %vm170, %v153, %v169
    %vm172 = vcmask 1046534
    %v173 = vsel %vm172, %v157, %v171
    %vm174 = vcmask 1047559
    %v175 = vsel %vm174, %v161, %v173
    %v177 = vadd.f32 %v47, %v175
    %vm178 = vcmask 64512
    %179 = vst.msk [vmem:[#allocation2] sm:$0xff] %vm178, %v177
    // Predicated region
    $region26: #{tpu_custom_call.1} parent=1 // pred_check
      %p180 = pneg %p41
    $region27: #{tpu_custom_call.1} parent=1 // pred_check_branch
      %182 = sbr.rel (%p180) target = $region29
    $region28: #{tpu_custom_call.1} parent=1 // pred_region
      %v183 = vld [vmem:[#allocation2] sm:$0xff]
      %v184 = vmul.f32 %v183, 0.00390625
      %v185 = vld [vmem:[#allocation6] sm:$0xff]
      %v186 = vld [vmem:[%s2] sm:$0x1]
      %v188 = vlaneseq
      %v189 = vshrl.u32 %v188, 7
      %v190 = vsub.s32 0, %v189
      %v191 = vrot.slane %v186, %v190
      %v194 = vsel %vm178, %v184, 0
      %196 = vmatprep.subr.mxu0 0.0
      %197 = vmatpush1.msra.mxu0 0.0
      %198 = vmatprep.subr.mxu0 0.0
      %199 = vmatpush1.msra.mxu0 0.0
      %200 = vmatprep.subr.mxu0 0.0
      %201 = vmatpush1.msra.mxu0 0.0
      %202 = vmatprep.subr.mxu0 0.0
      %203 = vmatpush1.msra.mxu0 0.0
      %204 = vmatprep.subr.mxu0 0.0
      %205 = vmatpush1.msra.mxu0 0.0
      %206 = vmatprep.subr.mxu0 0.0
      %207 = vmatpush1.msra.mxu0 0.0
      %208 = vmatprep.subr.mxu0 0.0
      %209 = vmatpush1.msra.mxu0 0.0
      %210 = vmatprep.subr.mxu0 0.0
      %211 = vmatpush1.msra.mxu0 0.0
      %212 = vmatprep.subr.mxu0 0.0
      %213 = vmatpush1.msra.mxu0 0.0
      %214 = vmatprep.subr.mxu0 0.0
      %215 = vmatpush1.msra.mxu0 0.0
      %216 = vmatprep.subr.mxu0 0.0
      %217 = vmatpush1.msra.mxu0 0.0
      %218 = vmatprep.subr.mxu0 0.0
      %219 = vmatpush1.msra.mxu0 0.0
      %220 = vmatprep.subr.mxu0 0.0
      %221 = vmatpush1.msra.mxu0 0.0
      %222 = vmatprep.subr.mxu0 0.0
      %223 = vmatpush1.msra.mxu0 0.0
      %224 = vmatprep.subr.mxu0 0.0
      %225 = vmatpush1.msra.mxu0 0.0
      %226 = vmatprep.subr.mxu0 0.0
      %227 = vmatpush1.msra.mxu0 %v185
      %228 = vmatprep.subr.mxu0 0.0
      %229 = vmatpush2.msra.mxu0 0.0
      %230 = vmatprep.subr.mxu0 0.0
      %231 = vmatpush2.msra.mxu0 0.0
      %232 = vmatprep.subr.mxu0 0.0
      %233 = vmatpush2.msra.mxu0 0.0
      %234 = vmatprep.subr.mxu0 0.0
      %235 = vmatpush2.msra.mxu0 0.0
      %236 = vmatprep.subr.mxu0 0.0
      %237 = vmatpush2.msra.mxu0 0.0
      %238 = vmatprep.subr.mxu0 0.0
      %239 = vmatpush2.msra.mxu0 0.0
      %240 = vmatprep.subr.mxu0 0.0
      %241 = vmatpush2.msra.mxu0 0.0
      %242 = vmatprep.subr.mxu0 0.0
      %243 = vmatpush2.msra.mxu0 0.0
      %244 = vmatprep.subr.mxu0 0.0
      %245 = vmatpush2.msra.mxu0 0.0
      %246 = vmatprep.subr.mxu0 0.0
      %247 = vmatpush2.msra.mxu0 0.0
      %248 = vmatprep.subr.mxu0 0.0
      %249 = vmatpush2.msra.mxu0 0.0
      %250 = vmatprep.subr.mxu0 0.0
      %251 = vmatpush2.msra.mxu0 0.0
      %252 = vmatprep.subr.mxu0 0.0
      %253 = vmatpush2.msra.mxu0 0.0
      %254 = vmatprep.subr.mxu0 0.0
      %255 = vmatpush2.msra.mxu0 0.0
      %256 = vmatprep.subr.mxu0 0.0
      %257 = vmatpush2.msra.mxu0 0.0
      %258 = vmatprep.subr.mxu0 0.0
      %259 = vmatpush2.msra.mxu0 0.0
      %260 = vmatprep.mubr.f32.mxu0 0.0
      %261 = vmatmul.mubr.f32.gmra.mxu0 %v194
      %v262 = vpop.f32.mrf.mxu0
      %v263 = vadd.f32 %v191, %v262
      %v264 = vpop.f32.mrf.mxu0
      %265 = vdwg.mxu0
      %266 = vst [vmem:[#allocation8] sm:$0xff] %v263
    $region29: #{tpu_custom_call.1} parent=1 // pred_fallthru
      _
    // Predicated region
    $region30: #{tpu_custom_call.1} parent=1 // pred_check
      _
    $region31: #{tpu_custom_call.1} parent=1 // pred_check_branch
      %268 = sbr.rel (0) target = $region33
    $region32: #{tpu_custom_call.1} parent=1 // pred_region
      %s270 = ssub.s32 128, 128
      %271 = vsyncadd [#allocation5], %s270
      %s273 = sshll.u32 [#allocation8], 4
      %s274 = int_to_ptr.vmem [resolvable:$true] %s273
      %276 = dma.vmem_to_hbm [thread:$0]  %s274, 128, %s3, [#allocation5]
    $region33: #{tpu_custom_call.1} parent=1 // pred_fallthru
      _
    // Predicated region
    $region34: #{tpu_custom_call.1} parent=1 // pred_check
      _
    $region35: #{tpu_custom_call.1} parent=1 // pred_check_branch
      %278 = sbr.rel (0) target = $region37
    $region36: #{tpu_custom_call.1} parent=1 // pred_region
      %279 = dma.done [#allocation5], 128
    $region37: #{tpu_custom_call.1} parent=1 // pred_fallthru
      _
    %280 = vsyncpa [#allocation4], 1
    %281 = vsyncpa [#allocation7], 1
    %282 = vsyncpa [#allocation5], 1

</llo_original>
